<compile_context>
chip_gen: v5e
topology: v5e:2x2
jax: 0.10.0
libtpu: 0.0.40
codegen_flags: <defaults>
</compile_context>

<pallas_src>
import jax
import jax.numpy as jnp
from jax.experimental import pallas as pl
from jax.experimental.pallas import tpu as pltpu


_LANE = 512                      # lane-dense width (multiple of 128)
_MAX_TILE_ROWS = 1024            # 1024 x 512 x 4B = 2 MiB per input tile
_VMEM_LIMIT = 48 * 1024 * 1024   # explicit; safe headroom on v7x's 64 MiB VMEM


def _round_up(x, m):
    return ((x + m - 1) // m) * m


def _smooth_l1(d):
    # beta = 1.0 (PyTorch default).  TODO(synk): plumb a beta argument if the
    # module is ever constructed with a non-default beta.
    ad = jnp.abs(d)
    return jnp.where(ad < 1.0, 0.5 * d * d, ad - 0.5)


# ---------------------------------------------------------------------------
# Kernel 1: elementwise SmoothL1 (reduction='none'), row-tiled & pipelined.
# ---------------------------------------------------------------------------
def _elementwise_kernel(s_ref, t_ref, o_ref):
    d = s_ref[...].astype(jnp.float32) - t_ref[...].astype(jnp.float32)
    o_ref[...] = _smooth_l1(d).astype(o_ref.dtype)


# ---------------------------------------------------------------------------
# Kernel 2: per-block partial sums (reduction='sum'/'mean').
# Output block (1, 8, LANE) is resident across the inner ("arbitrary") axis
# and acts as a vreg-shaped accumulator; the leading-axis fold of the tile is
# elementwise vreg adds (VPU only).
# ---------------------------------------------------------------------------
def _sum_kernel(s_ref, t_ref, o_ref):
    @pl.when(pl.program_id(1) == 0)
    def _():
        o_ref[...] = jnp.zeros_like(o_ref)

    d = s_ref[...].astype(jnp.float32) - t_ref[...].astype(jnp.float32)
    loss = _smooth_l1(d)                      # (T, LANE) f32
    tr, w = loss.shape
    # Leading-dim reshape is layout-free; axis-0 sum = VPU adds, not XLU.
    o_ref[0] += loss.reshape(tr // 8, 8, w).sum(axis=0)


def _pack_lane_dense(s, t):
    """Flatten + zero-pad both inputs into lane-dense [rows, _LANE] slabs."""
    total = s.size
    rows_raw = pl.cdiv(total, _LANE)
    tile_rows = min(_MAX_TILE_ROWS, _round_up(rows_raw, 8))
    rows = _round_up(rows_raw, tile_rows)
    n_tiles = rows // tile_rows
    if n_tiles > 1 and n_tiles % 2 == 1:      # make splittable across 2 TCs
        rows = _round_up(rows, 2 * tile_rows)
        n_tiles = rows // tile_rows
    pad = rows * _LANE - total
    s_flat = s.reshape(-1)
    t_flat = t.reshape(-1)
    if pad:
        s_flat = jnp.pad(s_flat, (0, pad))
        t_flat = jnp.pad(t_flat, (0, pad))
    return (s_flat.reshape(rows, _LANE), t_flat.reshape(rows, _LANE),
            tile_rows, n_tiles)


def smooth_l1_loss(s, t, reduction="mean", loss_weight=1.0):
    """Mirrors SmoothL1Loss.forward for inputs of shape [bs, n, dim]."""
    assert s.shape == t.shape, "s and t must have identical shapes"
    bs, n, dim = s.shape
    total = bs * n * dim
    s2, t2, tile_rows, n_tiles = _pack_lane_dense(s, t)

    if reduction == "none":
        out2 = pl.pallas_call(
            _elementwise_kernel,
            out_shape=jax.ShapeDtypeStruct(s2.shape, s.dtype),
            grid_spec=pltpu.PrefetchScalarGridSpec(
                num_scalar_prefetch=0,
                grid=(n_tiles,),
                in_specs=[
                    pl.BlockSpec((tile_rows, _LANE), lambda i: (i, 0)),
                    pl.BlockSpec((tile_rows, _LANE), lambda i: (i, 0)),
                ],
                out_specs=pl.BlockSpec((tile_rows, _LANE), lambda i: (i, 0)),
            ),
            compiler_params=pltpu.CompilerParams(
                dimension_semantics=("parallel",),
                vmem_limit_bytes=_VMEM_LIMIT),
        )(s2, t2)
        return out2.reshape(-1)[:total].reshape(bs, n, dim)

    if reduction not in ("mean", "sum"):
        raise ValueError(f"unknown reduction: {reduction}")

    n_outer = 2 if (n_tiles >= 2 and n_tiles % 2 == 0) else 1
    n_inner = n_tiles // n_outer

    partials = pl.pallas_call(
        _sum_kernel,
        out_shape=jax.ShapeDtypeStruct((n_outer, 8, _LANE), jnp.float32),
        grid_spec=pltpu.PrefetchScalarGridSpec(
            num_scalar_prefetch=0,
            grid=(n_outer, n_inner),
            in_specs=[
                pl.BlockSpec((tile_rows, _LANE),
                             lambda i, j: (i * n_inner + j, 0)),
                pl.BlockSpec((tile_rows, _LANE),
                             lambda i, j: (i * n_inner + j, 0)),
            ],
            out_specs=pl.BlockSpec((1, 8, _LANE), lambda i, j: (i, 0, 0)),
        ),
        compiler_params=pltpu.CompilerParams(
            dimension_semantics=("parallel", "arbitrary"),
            vmem_limit_bytes=_VMEM_LIMIT),
    )(s2, t2)

    total_loss = jnp.sum(partials)            # tiny (n_outer*8*512) reduce
    if reduction == "mean":
        return (total_loss / total) * loss_weight
    return total_loss * loss_weight


def _reference(s, t, reduction="mean", loss_weight=1.0):
    d = s.astype(jnp.float32) - t.astype(jnp.float32)
    ad = jnp.abs(d)
    loss = jnp.where(ad < 1.0, 0.5 * d * d, ad - 0.5)
    if reduction == "mean":
        return loss.mean() * loss_weight
    if reduction == "sum":
        return loss.sum() * loss_weight
    return loss


def _check(bs, n, dim, key, rtol):
    k1, k2 = jax.random.split(key)
    s = jax.random.normal(k1, (bs, n, dim), dtype=jnp.float32)
    t = jax.random.normal(k2, (bs, n, dim), dtype=jnp.float32)

    out_mean = jax.block_until_ready(
        smooth_l1_loss(s, t, reduction="mean", loss_weight=2.0))
    out_sum = jax.block_until_ready(smooth_l1_loss(s, t, reduction="sum"))
    out_none = jax.block_until_ready(smooth_l1_loss(s, t, reduction="none"))

    assert jnp.allclose(out_mean, _reference(s, t, "mean", 2.0),
                        rtol=rtol, atol=1e-5)
    assert jnp.allclose(out_sum, _reference(s, t, "sum"),
                        rtol=rtol, atol=1e-5)
    assert jnp.allclose(out_none, _reference(s, t, "none"),
                        rtol=1e-6, atol=1e-6)


if __name__ == "__main__":
    key = jax.random.PRNGKey(0)
    k_small, k_big = jax.random.split(key)

    # Small case from the module spec: [bs, n, dim] = [2, 8, 32].
    _check(2, 8, 32, k_small, rtol=1e-5)
    # Moderate case exercising multi-tile, padding and the 2-TC partial-sum
    # split (n_tiles > 1, odd -> padded even, n_outer = 2).
    _check(2, 20000, 32, k_big, rtol=1e-4)

    print("KERNEL_OK")
</pallas_src>

<mosaic_0001>
module attributes {stable_mosaic.version = 11 : i64} {
  func.func @_sum_kernel(%arg0: i32, %arg1: i32, %arg2: memref<8x512xf32, #tpu.memory_space<vmem>>, %arg3: memref<8x512xf32, #tpu.memory_space<vmem>>, %arg4: memref<1x8x512xf32, #tpu.memory_space<vmem>>) attributes {dimension_semantics = [#tpu.dimension_semantics<parallel>, #tpu.dimension_semantics<arbitrary>], iteration_bounds = array<i64: 1, 1>, scalar_prefetch = 0 : i64, scratch_operands = 0 : i64, tpu.core_type = #tpu.core_type<tc>, window_params = [{transform_indices = @transform_0, window_bounds = array<i64: 8, 512>}, {transform_indices = @transform_1, window_bounds = array<i64: 8, 512>}, {transform_indices = @transform_2, window_bounds = array<i64: 1, 8, 512>}]} {
    %c0_i32 = arith.constant 0 : i32
    %0 = arith.cmpi eq, %arg1, %c0_i32 : i32
    %1 = arith.extui %0 : i1 to i32
    %c0_i32_0 = arith.constant 0 : i32
    %2 = arith.cmpi ne, %1, %c0_i32_0 : i32
    scf.if %2 {
      %cst_13 = arith.constant 0.000000e+00 : f32
      %23 = vector.broadcast %cst_13 : f32 to vector<1x8x512xf32>
      %c0_14 = arith.constant 0 : index
      %c0_15 = arith.constant 0 : index
      %c0_16 = arith.constant 0 : index
      %24 = vector.load %arg4[%c0_14, %c0_15, %c0_16] : memref<1x8x512xf32, #tpu.memory_space<vmem>>, vector<1x8x512xf32>
      tpu.vector_store %arg4[%c0_14, %c0_15, %c0_16], %23 {strides = array<i32>} : memref<1x8x512xf32, #tpu.memory_space<vmem>>, vector<1x8x512xf32>,
    } else {
    }
    %c0 = arith.constant 0 : index
    %c0_1 = arith.constant 0 : index
    %3 = vector.load %arg2[%c0, %c0_1] : memref<8x512xf32, #tpu.memory_space<vmem>>, vector<8x512xf32>
    %c0_2 = arith.constant 0 : index
    %c0_3 = arith.constant 0 : index
    %4 = vector.load %arg3[%c0_2, %c0_3] : memref<8x512xf32, #tpu.memory_space<vmem>>, vector<8x512xf32>
    %5 = arith.subf %3, %4 : vector<8x512xf32>
    %6 = math.absf %5 : vector<8x512xf32>
    %cst = arith.constant 1.000000e+00 : f32
    %7 = vector.broadcast %cst : f32 to vector<8x512xf32>
    %8 = arith.cmpf olt, %6, %7 : vector<8x512xf32>
    %cst_4 = arith.constant 5.000000e-01 : f32
    %9 = vector.broadcast %cst_4 : f32 to vector<8x512xf32>
    %10 = arith.mulf %9, %5 : vector<8x512xf32>
    %11 = arith.mulf %10, %5 : vector<8x512xf32>
    %cst_5 = arith.constant 5.000000e-01 : f32
    %12 = vector.broadcast %cst_5 : f32 to vector<8x512xf32>
    %13 = arith.subf %6, %12 : vector<8x512xf32>
    %14 = arith.select %8, %11, %13 : vector<8x512xi1>, vector<8x512xf32>
    %c0_6 = arith.constant 0 : index
    %c0_7 = arith.constant 0 : index
    %c0_8 = arith.constant 0 : index
    %15 = vector.load %arg4[%c0_6, %c0_7, %c0_8] : memref<1x8x512xf32, #tpu.memory_space<vmem>>, vector<1x8x512xf32>
    %16 = vector.shape_cast %15 : vector<1x8x512xf32> to vector<8x512xf32>
    %17 = vector.shape_cast %14 : vector<8x512xf32> to vector<1x8x512xf32>
    %cst_9 = arith.constant dense<0.000000e+00> : vector<8x512xf32>
    %18 = vector.multi_reduction <add>, %17, %cst_9 [0] : vector<1x8x512xf32> to vector<8x512xf32>
    %19 = arith.addf %16, %18 : vector<8x512xf32>
    %c0_10 = arith.constant 0 : index
    %c0_11 = arith.constant 0 : index
    %c0_12 = arith.constant 0 : index
    %20 = vector.load %arg4[%c0_10, %c0_11, %c0_12] : memref<1x8x512xf32, #tpu.memory_space<vmem>>, vector<1x8x512xf32>
    %21 = vector.shape_cast %20 : vector<1x8x512xf32> to vector<8x512xf32>
    %22 = vector.shape_cast %19 : vector<8x512xf32> to vector<1x8x512xf32>
    tpu.vector_store %arg4[%c0_10, %c0_11, %c0_12], %22 {strides = array<i32>} : memref<1x8x512xf32, #tpu.memory_space<vmem>>, vector<1x8x512xf32>,
    return
  }
  func.func @transform_0(%arg0: i32, %arg1: i32) -> (i32, i32) {
    %c1_i32 = arith.constant 1 : i32
    %0 = arith.muli %arg0, %c1_i32 : i32
    %1 = arith.addi %0, %arg1 : i32
    %c0_i32 = arith.constant 0 : i32
    %c0_i32_0 = arith.constant 0 : i32
    return %1, %c0_i32 : i32, i32
  }
  func.func @transform_1(%arg0: i32, %arg1: i32) -> (i32, i32) {
    %c1_i32 = arith.constant 1 : i32
    %0 = arith.muli %arg0, %c1_i32 : i32
    %1 = arith.addi %0, %arg1 : i32
    %c0_i32 = arith.constant 0 : i32
    %c0_i32_0 = arith.constant 0 : i32
    return %1, %c0_i32 : i32, i32
  }
  func.func @transform_2(%arg0: i32, %arg1: i32) -> (i32, i32, i32) {
    %c0_i32 = arith.constant 0 : i32
    %c0_i32_0 = arith.constant 0 : i32
    %c0_i32_1 = arith.constant 0 : i32
    return %arg0, %c0_i32, %c0_i32_0 : i32, i32, i32
  }
}

</mosaic_0001>

<llo_original>
// kernel: tpu_custom_call.1
$region0: #{tpu_custom_call.1}
  #allocation0 [shape = 'u32[]', space=smem, size = 0x4, offset = 0x4, fixed_abs, tag = 'smem constant byte address 0x4 - core index']
  #allocation1 [shape = 'u32[72,128]{1,0:T(1,128)}', space=vmem, size = 0x9000, scoped, tag = 'internal scratch']
  %s0 = inlined_call_operand.hbm [shape: f32[8,512], index: 0, kind: input, shape index: {}]
  %s1 = inlined_call_operand.hbm [shape: f32[8,512], index: 1, kind: input, shape index: {}]
  %s2 = inlined_call_operand.hbm [shape: f32[1,8,512], index: 2, kind: output, shape index: {}]
  %s3 = sld [smem:[#allocation0]]
  $region30: #{tpu_custom_call.1} parent=0
    _
  %s5 = ssub.s32 1, %s3
  %s6 = scalar_select 0, %s5, %s3
  $region1: #{tpu_custom_call.1} parent=0
    #allocation2 [shape = 'u8[16384]{0}', space=vmem, size = 0x4000, scoped, tag = 'input window, operand 0, single buffered']
    #allocation3 [shape = 's32[1]{0}', space=sflag, size = 0x4, scoped, tag = 'scoped memory for tpu_custom_call.1']
    #allocation4 [shape = 's32[1]{0}', space=sflag, size = 0x4, scoped, tag = 'scoped memory for tpu_custom_call.1']
    #allocation5 [shape = 'u8[16384]{0}', space=vmem, size = 0x4000, scoped, tag = 'input window, operand 1, single buffered']
    #allocation6 [shape = 's32[1]{0}', space=sflag, size = 0x4, scoped, tag = 'scoped memory for tpu_custom_call.1']
    #allocation7 [shape = 'u8[16384]{0}', space=vmem, size = 0x4000, scoped, tag = 'output window, operand 0, single buffered']
    %7 = vsyncpa [#allocation3], 0
    %8 = vsyncpa [#allocation6], 0
    %9 = vsyncpa [#allocation4], 0
    // Predicated region
    $region2: #{tpu_custom_call.1} parent=1 // pred_check
      _
    $region3: #{tpu_custom_call.1} parent=1 // pred_check_branch
      %11 = sbr.rel (0) target = $region5
    $region4: #{tpu_custom_call.1} parent=1 // pred_region
      %s12 = sadd.s32 0, 0
      %14 = vsyncadd [#allocation3], 0
      %s15 = smul.addr %s12, 4
      %s16 = smul.addr %s15, 8
      %s17 = scalar_lea.hbm %s0, %s16
      %s19 = sshll.u32 %s17, 4
      %s20 = int_to_ptr.hbm [resolvable:$true] %s19
      %s21 = sshll.u32 [#allocation2], 4
      %s22 = int_to_ptr.vmem [resolvable:$true] %s21
      %24 = dma.hbm_to_vmem [thread:$0]  %s20, 512, %s22, [#allocation3]
    $region5: #{tpu_custom_call.1} parent=1 // pred_fallthru
      _
    // Predicated region
    $region6: #{tpu_custom_call.1} parent=1 // pred_check
      _
    $region7: #{tpu_custom_call.1} parent=1 // pred_check_branch
      %26 = sbr.rel (0) target = $region9
    $region8: #{tpu_custom_call.1} parent=1 // pred_region
      %s27 = sadd.s32 0, 0
      %29 = vsyncadd [#allocation6], 0
      %s30 = smul.addr %s27, 4
      %s31 = smul.addr %s30, 8
      %s32 = scalar_lea.hbm %s1, %s31
      %s34 = sshll.u32 %s32, 4
      %s35 = int_to_ptr.hbm [resolvable:$true] %s34
      %s36 = sshll.u32 [#allocation5], 4
      %s37 = int_to_ptr.vmem [resolvable:$true] %s36
      %39 = dma.hbm_to_vmem [thread:$0]  %s35, 512, %s37, [#allocation6]
    $region9: #{tpu_custom_call.1} parent=1 // pred_fallthru
      _
    // Predicated region
    $region10: #{tpu_custom_call.1} parent=1 // pred_check
      _
    $region11: #{tpu_custom_call.1} parent=1 // pred_check_branch
      %41 = sbr.rel (0) target = $region13
    $region12: #{tpu_custom_call.1} parent=1 // pred_region
      %43 = dma.done [#allocation3], 512
    $region13: #{tpu_custom_call.1} parent=1 // pred_fallthru
      _
    // Predicated region
    $region14: #{tpu_custom_call.1} parent=1 // pred_check
      _
    $region15: #{tpu_custom_call.1} parent=1 // pred_check_branch
      %45 = sbr.rel (0) target = $region17
    $region16: #{tpu_custom_call.1} parent=1 // pred_region
      %47 = dma.done [#allocation6], 512
    $region17: #{tpu_custom_call.1} parent=1 // pred_fallthru
      _
    %s48 = sadd.s32 0, 0
    %s49 = sadd.s32 0, 0
    %p50 = scmp.eq.s32.totalorder 0, 0
    // Predicated region
    $region18: #{tpu_custom_call.1} parent=1 // pred_check
      %p51 = pneg %p50
    $region19: #{tpu_custom_call.1} parent=1 // pred_check_branch
      %53 = sbr.rel (%p51) target = $region21
    $region20: #{tpu_custom_call.1} parent=1 // pred_region
      %54 = vst [vmem:[#allocation7] sm:$0xff] 0.0
      %55 = vst [vmem:[#allocation7 + $0x8] sm:$0xff] 0.0
      %56 = vst [vmem:[#allocation7 + $0x10] sm:$0xff] 0.0
      %57 = vst [vmem:[#allocation7 + $0x18] sm:$0xff] 0.0
    $region21: #{tpu_custom_call.1} parent=1 // pred_fallthru
      _
    %v58 = vld [vmem:[#allocation2] sm:$0xff]
    %v59 = vld [vmem:[#allocation2 + $0x8] sm:$0xff]
    %v60 = vld [vmem:[#allocation2 + $0x10] sm:$0xff]
    %v61 = vld [vmem:[#allocation2 + $0x18] sm:$0xff]
    %v62 = vld [vmem:[#allocation5] sm:$0xff]
    %v63 = vld [vmem:[#allocation5 + $0x8] sm:$0xff]
    %v64 = vld [vmem:[#allocation5 + $0x10] sm:$0xff]
    %v65 = vld [vmem:[#allocation5 + $0x18] sm:$0xff]
    %v66 = vsub.f32 %v58, %v62
    %v67 = vsub.f32 %v59, %v63
    %v68 = vsub.f32 %v60, %v64
    %v69 = vsub.f32 %v61, %v65
    %v70 = vand.u32 2147483647, %v66
    %v71 = vand.u32 2147483647, %v67
    %v72 = vand.u32 2147483647, %v68
    %v73 = vand.u32 2147483647, %v69
    %vm74 = vcmp.lt.f32.partialorder %v70, 1.0
    %vm75 = vcmp.lt.f32.partialorder %v71, 1.0
    %vm76 = vcmp.lt.f32.partialorder %v72, 1.0
    %vm77 = vcmp.lt.f32.partialorder %v73, 1.0
    %v78 = vmul.f32 %v66, 0.5
    %v79 = vmul.f32 %v67, 0.5
    %v80 = vmul.f32 %v68, 0.5
    %v81 = vmul.f32 %v69, 0.5
    %v82 = vmul.f32 %v78, %v66
    %v83 = vmul.f32 %v79, %v67
    %v84 = vmul.f32 %v80, %v68
    %v85 = vmul.f32 %v81, %v69
    %v86 = vsub.f32 %v70, 0.5
    %v87 = vsub.f32 %v71, 0.5
    %v88 = vsub.f32 %v72, 0.5
    %v89 = vsub.f32 %v73, 0.5
    %v90 = vsel %vm74, %v82, %v86
    %v91 = vsel %vm75, %v83, %v87
    %v92 = vsel %vm76, %v84, %v88
    %v93 = vsel %vm77, %v85, %v89
    %v94 = vld [vmem:[#allocation7] sm:$0xff]
    %v95 = vld [vmem:[#allocation7 + $0x8] sm:$0xff]
    %v96 = vld [vmem:[#allocation7 + $0x10] sm:$0xff]
    %v97 = vld [vmem:[#allocation7 + $0x18] sm:$0xff]
    %v98 = vadd.f32 %v90, 0.0
    %v99 = vadd.f32 %v91, 0.0
    %v100 = vadd.f32 %v92, 0.0
    %v101 = vadd.f32 %v93, 0.0
    %v102 = vadd.f32 %v94, %v98
    %v103 = vadd.f32 %v95, %v99
    %v104 = vadd.f32 %v96, %v100
    %v105 = vadd.f32 %v97, %v101
    %106 = vst [vmem:[#allocation7] sm:$0xff] %v102
    %107 = vst [vmem:[#allocation7 + $0x8] sm:$0xff] %v103
    %108 = vst [vmem:[#allocation7 + $0x10] sm:$0xff] %v104
    %109 = vst [vmem:[#allocation7 + $0x18] sm:$0xff] %v105
    // Predicated region
    $region22: #{tpu_custom_call.1} parent=1 // pred_check
      _
    $region23: #{tpu_custom_call.1} parent=1 // pred_check_branch
      %111 = sbr.rel (0) target = $region25
    $region24: #{tpu_custom_call.1} parent=1 // pred_region
      %113 = vsyncadd [#allocation4], 0
      %s115 = sshll.u32 [#allocation7], 4
      %s116 = int_to_ptr.vmem [resolvable:$true] %s115
      %s117 = sshll.u32 %s2, 4
      %s118 = int_to_ptr.hbm [resolvable:$true] %s117
      %120 = dma.vmem_to_hbm [thread:$0]  %s116, 512, %s118, [#allocation4]
    $region25: #{tpu_custom_call.1} parent=1 // pred_fallthru
      _
    // Predicated region
    $region26: #{tpu_custom_call.1} parent=1 // pred_check
      _
    $region27: #{tpu_custom_call.1} parent=1 // pred_check_branch
      %122 = sbr.rel (0) target = $region29
    $region28: #{tpu_custom_call.1} parent=1 // pred_region
      %124 = dma.done [#allocation4], 512
    $region29: #{tpu_custom_call.1} parent=1 // pred_fallthru
      _
    %125 = vsyncpa [#allocation3], 1
    %126 = vsyncpa [#allocation6], 1
    %127 = vsyncpa [#allocation4], 1

</llo_original>
